<compile_context>
chip_gen: v5e
topology: v5e:2x2
jax: 0.10.0
libtpu: 0.0.40
codegen_flags: <defaults>
</compile_context>

<pallas_src>
import functools

import numpy as np
import jax
import jax.numpy as jnp
from jax.experimental import pallas as pl
from jax.experimental.pallas import tpu as pltpu


def _patch_sim_kernel(mean_ref, q_ref, key_ref, out_ref):
    """One (batch, S-tile) block: center -> L2-normalize over C -> similarity."""
    mu = mean_ref[0]                                          # (C, 1) f32
    # query columns: raw gathered rows, re-centered and normalized (Num*C work)
    q = q_ref[0].astype(jnp.float32) - mu                     # (C, Num)
    q_ss = jnp.sum(q * q, axis=0, keepdims=True)              # (1, Num)
    qn = q * jax.lax.rsqrt(jnp.maximum(q_ss, 1e-24))          # == q / max(||q||,1e-12)
    # key tile: centered + normalized along C (lane-dense, S on lanes)
    k = key_ref[0].astype(jnp.float32) - mu                   # (C, tS)
    k_ss = jnp.sum(k * k, axis=0, keepdims=True)              # (1, tS)
    kn = k * jax.lax.rsqrt(jnp.maximum(k_ss, 1e-24))
    # patch_sim tile = qn^T @ kn   (contract C; output (Num, tS), S on lanes)
    out_ref[0] = jax.lax.dot_general(
        qn, kn, (((0,), (0,)), ((), ())),
        preferred_element_type=jnp.float32)


def _choose_s_tile(S, cap=2048):
    """Largest multiple-of-128 divisor of S up to `cap`; fall back to full S."""
    best = None
    t = 128
    while t <= min(S, cap):
        if S % t == 0:
            best = t
        t += 128
    return best if best is not None else S


def patch_sim(feat_nchw, patch_ids):
    """Pallas PatchSim forward. Returns (patch_sim (B, Num, W*H), patch_ids)."""
    B, C, W, H = feat_nchw.shape
    S = W * H
    num = int(patch_ids.shape[0])
    ids = patch_ids.astype(jnp.int32)

    # C-major, lane-dense layout; pure reshape (no HBM transpose), native dtype.
    feat_bcs = feat_nchw.reshape(B, C, S)
    # Tiny side inputs: per-(b,c) spatial mean and the raw query columns.
    mean_bc1 = jnp.mean(feat_bcs.astype(jnp.float32), axis=-1, keepdims=True)  # (B, C, 1)
    q_raw = jnp.take(feat_bcs, ids, axis=2)                                    # (B, C, Num)

    tS = _choose_s_tile(S)
    sim = pl.pallas_call(
        _patch_sim_kernel,
        out_shape=jax.ShapeDtypeStruct((B, num, S), jnp.float32),
        grid=(B, S // tS),
        in_specs=[
            pl.BlockSpec((1, C, 1), lambda b, s: (b, 0, 0)),     # spatial mean
            pl.BlockSpec((1, C, num), lambda b, s: (b, 0, 0)),   # raw query cols
            pl.BlockSpec((1, C, tS), lambda b, s: (b, 0, s)),    # key S-tile
        ],
        out_specs=pl.BlockSpec((1, num, tS), lambda b, s: (b, 0, s)),
        compiler_params=pltpu.CompilerParams(
            dimension_semantics=("parallel", "parallel")),
    )(mean_bc1, q_raw, feat_bcs)
    return sim, patch_ids


def patch_sim_ref(feat_nchw, patch_ids):
    """Pure-JAX reference mirroring the PyTorch forward (norm=True, full key)."""
    B, C, W, H = feat_nchw.shape
    feat = feat_nchw - feat_nchw.mean(axis=(2, 3), keepdims=True)
    nrm = jnp.sqrt(jnp.sum(feat * feat, axis=1, keepdims=True))
    feat = feat / jnp.maximum(nrm, 1e-12)
    fr = jnp.transpose(feat, (0, 2, 3, 1)).reshape(B, W * H, C)
    query = fr[:, patch_ids, :]                 # (B, Num, C)
    key = feat.reshape(B, C, W * H)             # (B, C, S)
    return jnp.einsum("bnc,bcs->bns", query, key)


# TODO(synk): the `pw < W and ph < H` branch (per-patch local key windows built
# with a Python loop of dynamic slices) is not implemented; we reproduce the
# full-spatial-key branch (patch_size >= W), which is the branch exercised here.

if __name__ == "__main__":
    B, C, W, H = 2, 4, 16, 16
    S = W * H
    PATCH_NUMS = 64

    key = jax.random.PRNGKey(0)
    k_feat, k_ids = jax.random.split(key)
    feat = jax.random.normal(k_feat, (B, C, W, H), dtype=jnp.float32)
    # torch.randperm(W*H)[:patch_nums] equivalent, deterministic
    patch_ids = jax.random.permutation(k_ids, S)[:PATCH_NUMS]

    sim, ids_out = patch_sim(feat, patch_ids)
    sim = jax.block_until_ready(sim)

    ref = patch_sim_ref(feat, patch_ids)
    np.testing.assert_allclose(np.asarray(sim), np.asarray(ref),
                               rtol=1e-4, atol=1e-4)
    assert sim.shape == (B, PATCH_NUMS, S)
    print("KERNEL_OK")
</pallas_src>

<mosaic_0001>
module attributes {stable_mosaic.version = 11 : i64} {
  func.func @_patch_sim_kernel(%arg0: i32, %arg1: i32, %arg2: memref<1x4x1xf32, #tpu.memory_space<vmem>>, %arg3: memref<1x4x64xf32, #tpu.memory_space<vmem>>, %arg4: memref<1x4x256xf32, #tpu.memory_space<vmem>>, %arg5: memref<1x64x256xf32, #tpu.memory_space<vmem>>) attributes {dimension_semantics = [#tpu.dimension_semantics<parallel>, #tpu.dimension_semantics<parallel>], iteration_bounds = array<i64: 2, 1>, scalar_prefetch = 0 : i64, scratch_operands = 0 : i64, tpu.core_type = #tpu.core_type<tc>, window_params = [{transform_indices = @transform_0, window_bounds = array<i64: 1, 4, 1>}, {transform_indices = @transform_1, window_bounds = array<i64: 1, 4, 64>}, {transform_indices = @transform_2, window_bounds = array<i64: 1, 4, 256>}, {transform_indices = @transform_3, window_bounds = array<i64: 1, 64, 256>}]} {
    %c0 = arith.constant 0 : index
    %c0_0 = arith.constant 0 : index
    %c0_1 = arith.constant 0 : index
    %0 = vector.load %arg2[%c0, %c0_0, %c0_1] : memref<1x4x1xf32, #tpu.memory_space<vmem>>, vector<1x4x1xf32>
    %1 = vector.shape_cast %0 : vector<1x4x1xf32> to vector<4x1xf32>
    %c0_2 = arith.constant 0 : index
    %c0_3 = arith.constant 0 : index
    %c0_4 = arith.constant 0 : index
    %2 = vector.load %arg3[%c0_2, %c0_3, %c0_4] : memref<1x4x64xf32, #tpu.memory_space<vmem>>, vector<1x4x64xf32>
    %3 = vector.shape_cast %2 : vector<1x4x64xf32> to vector<4x64xf32>
    %4 = vector.broadcast %1 : vector<4x1xf32> to vector<4x64xf32>
    %5 = arith.subf %3, %4 : vector<4x64xf32>
    %6 = arith.mulf %5, %5 : vector<4x64xf32>
    %cst = arith.constant dense<0.000000e+00> : vector<64xf32>
    %7 = vector.multi_reduction <add>, %6, %cst [0] : vector<4x64xf32> to vector<64xf32>
    %8 = vector.shape_cast %7 : vector<64xf32> to vector<1x64xf32>
    %cst_5 = arith.constant 1.000000e-24 : f32
    %9 = vector.broadcast %cst_5 : f32 to vector<1x64xf32>
    %10 = arith.maximumf %8, %9 : vector<1x64xf32>
    %11 = math.rsqrt %10 : vector<1x64xf32>
    %12 = vector.broadcast %11 : vector<1x64xf32> to vector<4x64xf32>
    %13 = arith.mulf %5, %12 : vector<4x64xf32>
    %c0_6 = arith.constant 0 : index
    %c0_7 = arith.constant 0 : index
    %c0_8 = arith.constant 0 : index
    %14 = vector.load %arg4[%c0_6, %c0_7, %c0_8] : memref<1x4x256xf32, #tpu.memory_space<vmem>>, vector<1x4x256xf32>
    %15 = vector.shape_cast %14 : vector<1x4x256xf32> to vector<4x256xf32>
    %16 = vector.broadcast %1 : vector<4x1xf32> to vector<4x256xf32>
    %17 = arith.subf %15, %16 : vector<4x256xf32>
    %18 = arith.mulf %17, %17 : vector<4x256xf32>
    %cst_9 = arith.constant dense<0.000000e+00> : vector<256xf32>
    %19 = vector.multi_reduction <add>, %18, %cst_9 [0] : vector<4x256xf32> to vector<256xf32>
    %20 = vector.shape_cast %19 : vector<256xf32> to vector<1x256xf32>
    %cst_10 = arith.constant 1.000000e-24 : f32
    %21 = vector.broadcast %cst_10 : f32 to vector<1x256xf32>
    %22 = arith.maximumf %20, %21 : vector<1x256xf32>
    %23 = math.rsqrt %22 : vector<1x256xf32>
    %24 = vector.broadcast %23 : vector<1x256xf32> to vector<4x256xf32>
    %25 = arith.mulf %17, %24 : vector<4x256xf32>
    %cst_11 = arith.constant dense<0.000000e+00> : vector<64x256xf32>
    %26 = tpu.matmul %13, %25, %cst_11 {dimension_numbers = #tpu.dot_dimension_numbers<[0], [0], [1], [1], [0, 1, 1, 1], [], []>} : vector<4x64xf32>, vector<4x256xf32>, vector<64x256xf32> -> vector<64x256xf32>
    %c0_12 = arith.constant 0 : index
    %c0_13 = arith.constant 0 : index
    %c0_14 = arith.constant 0 : index
    %27 = vector.load %arg5[%c0_12, %c0_13, %c0_14] : memref<1x64x256xf32, #tpu.memory_space<vmem>>, vector<1x64x256xf32>
    %28 = vector.shape_cast %27 : vector<1x64x256xf32> to vector<64x256xf32>
    %29 = vector.shape_cast %26 : vector<64x256xf32> to vector<1x64x256xf32>
    tpu.vector_store %arg5[%c0_12, %c0_13, %c0_14], %29 {strides = array<i32>} : memref<1x64x256xf32, #tpu.memory_space<vmem>>, vector<1x64x256xf32>,
    return
  }
  func.func @transform_0(%arg0: i32, %arg1: i32) -> (i32, i32, i32) {
    %c0_i32 = arith.constant 0 : i32
    %c0_i32_0 = arith.constant 0 : i32
    %c0_i32_1 = arith.constant 0 : i32
    return %arg0, %c0_i32, %c0_i32_0 : i32, i32, i32
  }
  func.func @transform_1(%arg0: i32, %arg1: i32) -> (i32, i32, i32) {
    %c0_i32 = arith.constant 0 : i32
    %c0_i32_0 = arith.constant 0 : i32
    %c0_i32_1 = arith.constant 0 : i32
    return %arg0, %c0_i32, %c0_i32_0 : i32, i32, i32
  }
  func.func @transform_2(%arg0: i32, %arg1: i32) -> (i32, i32, i32) {
    %c0_i32 = arith.constant 0 : i32
    %c0_i32_0 = arith.constant 0 : i32
    return %arg0, %c0_i32, %arg1 : i32, i32, i32
  }
  func.func @transform_3(%arg0: i32, %arg1: i32) -> (i32, i32, i32) {
    %c0_i32 = arith.constant 0 : i32
    %c0_i32_0 = arith.constant 0 : i32
    return %arg0, %c0_i32, %arg1 : i32, i32, i32
  }
}

</mosaic_0001>

<llo_original>
// kernel: tpu_custom_call.1
$region0: #{tpu_custom_call.1}
  #allocation0 [shape = 'u32[]', space=smem, size = 0x4, offset = 0x4, fixed_abs, tag = 'smem constant byte address 0x4 - core index']
  #allocation1 [shape = 'u32[72,128]{1,0:T(1,128)}', space=vmem, size = 0x9000, scoped, tag = 'internal scratch']
  %s0 = inlined_call_operand.vmem [shape: f32[2,4,1], index: 0, kind: input, shape index: {}]
  %s1 = inlined_call_operand.vmem [shape: f32[2,4,64], index: 1, kind: input, shape index: {}]
  %s2 = inlined_call_operand.hbm [shape: f32[2,4,256], index: 2, kind: input, shape index: {}]
  %s3 = inlined_call_operand.hbm [shape: f32[2,64,256], index: 3, kind: output, shape index: {}]
  %s4 = sld [smem:[#allocation0]]
  $region49: #{tpu_custom_call.1} parent=0
    _
  %s6 = ssub.s32 1, %s4
  %s7 = scalar_select 0, %s6, %s4
  $region1: #{tpu_custom_call.1} parent=0
    #allocation2 [shape = 'u8[8192]{0}', space=vmem, size = 0x2000, scoped, tag = 'input window, operand 2']
    #allocation3 [shape = 's32[2]{0}', space=sflag, size = 0x8, scoped, tag = 'scoped memory for tpu_custom_call.1']
    #allocation4 [shape = 's32[2]{0}', space=sflag, size = 0x8, scoped, tag = 'scoped memory for tpu_custom_call.1']
    #allocation5 [shape = 'u8[131072]{0}', space=vmem, size = 0x20000, scoped, tag = 'output window, operand 0']
    %8 = vsyncpa [#allocation3], 0
    %s9 = scalar_lea.sflag [#allocation3], 1
    %10 = vsyncpa %s9, 0
    %11 = vsyncpa [#allocation4], 0
    %s12 = scalar_lea.sflag [#allocation4], 1
    %13 = vsyncpa %s12, 0
    loop: start=0, step=1, limit=4
    $region2: #{tpu_custom_call.1} parent=1 // loop_pre_header
      _
    $region3: #{tpu_custom_call.1} parent=1 // loop_header
      %s15 = sphi 0, %s19
      %p16 = scmp.ge.s32.totalorder %s15, 4
      %s22 = sphi 0, %s34
      %s23 = sphi 0, %s30
      %s24 = sphi 0, %s22
      %s25 = sphi 0, %s23
      %s26 = sphi 0, %s24
      %s27 = sphi 0, %s25
      %s37 = sphi 0, %s39
      %s40 = sphi 0, %s37
      %s41 = sphi 0, %s40
      %s57 = sphi 0, %s41
      %s63 = sphi 0, %s65
      %s66 = sphi 0, %s63
      %s67 = sphi 0, %s66
      %s83 = sphi 0, %s67
      %s91 = sphi 0, %s93
      %s94 = sphi 0, %s91
      %s95 = sphi 0, %s94
      %s111 = sphi 0, %s95
      %s119 = sphi 0, %s121
      %s122 = sphi 0, %s119
      %s123 = sphi 0, %s122
      %s139 = sphi 0, %s123
    $region4: #{tpu_custom_call.1} parent=1 // loop_header_branch
      %18 = sbr.rel (%p16) target = $region8
    $region5: #{tpu_custom_call.1} parent=1 // loop_body
      %s20 = ssub.s32 %s15, 1
      %s21 = ssub.s32 %s15, 2
      %s28 = sadd.s32 1, %s23
      %p29 = scmp.ge.s32.totalorder %s28, 1
      %s30 = scalar_select %p29, 0, %s28
      %s31 = sadd.s32 1, %s22
      %s32 = scalar_select %p29, %s31, %s22
      %p33 = scmp.ge.s32.totalorder %s32, 2
      %s34 = scalar_select %p33, 0, %s32
      %s35 = ssub.s32 %s22, %s34
      %p36 = scmp.eq.s32.totalorder %s35, 0
      %s38 = sadd.s32 %s37, 1
      %s39 = scalar_select %p36, %s37, %s38
      %p42 = pneg %p36
      %p43 = scmp.eq.s32.totalorder %s15, 1
      %p44 = por %p42, %p43
      %p45 = scmp.ne.s32.totalorder %s37, %s40
      %p46 = scmp.eq.s32.totalorder %s15, 0
      %p47 = por %p45, %p46
      %p48 = scmp.ne.s32.totalorder %s37, %s40
      %p49 = scmp.eq.s32.totalorder %s20, 1
      %p50 = por %p48, %p49
      %p51 = scmp.ne.s32.totalorder %s40, %s41
      %p52 = scmp.eq.s32.totalorder %s20, 0
      %p53 = por %p51, %p52
      %p54 = scmp.ne.s32.totalorder %s40, %s41
      %p55 = scmp.eq.s32.totalorder %s21, 1
      %p56 = por %p54, %p55
      %p58 = scmp.ne.s32.totalorder %s41, %s57
      %p59 = scmp.eq.s32.totalorder %s21, 0
      %p60 = por %p58, %p59
      %s61 = ssub.s32 %s22, %s34
      %p62 = scmp.eq.s32.totalorder %s61, 0
      %s64 = sadd.s32 %s63, 1
      %s65 = scalar_select %p62, %s63, %s64
      %p68 = pneg %p62
      %p69 = scmp.eq.s32.totalorder %s15, 1
      %p70 = por %p68, %p69
      %p71 = scmp.ne.s32.totalorder %s63, %s66
      %p72 = scmp.eq.s32.totalorder %s15, 0
      %p73 = por %p71, %p72
      %p74 = scmp.ne.s32.totalorder %s63, %s66
      %p75 = scmp.eq.s32.totalorder %s20, 1
      %p76 = por %p74, %p75
      %p77 = scmp.ne.s32.totalorder %s66, %s67
      %p78 = scmp.eq.s32.totalorder %s20, 0
      %p79 = por %p77, %p78
      %p80 = scmp.ne.s32.totalorder %s66, %s67
      %p81 = scmp.eq.s32.totalorder %s21, 1
      %p82 = por %p80, %p81
      %p84 = scmp.ne.s32.totalorder %s67, %s83
      %p85 = scmp.eq.s32.totalorder %s21, 0
      %p86 = por %p84, %p85
      %s87 = ssub.s32 %s22, %s34
      %s88 = ssub.s32 %s23, %s30
      %s89 = sor.u32 %s87, %s88
      %p90 = scmp.eq.s32.totalorder %s89, 0
      %s92 = sadd.s32 %s91, 1
      %s93 = scalar_select %p90, %s91, %s92
      %p96 = pneg %p90
      %p97 = scmp.eq.s32.totalorder %s15, 1
      %p98 = por %p96, %p97
      %p99 = scmp.ne.s32.totalorder %s91, %s94
      %p100 = scmp.eq.s32.totalorder %s15, 0
      %p101 = por %p99, %p100
      %p102 = scmp.ne.s32.totalorder %s91, %s94
      %p103 = scmp.eq.s32.totalorder %s20, 1
      %p104 = por %p102, %p103
      %p105 = scmp.ne.s32.totalorder %s94, %s95
      %p106 = scmp.eq.s32.totalorder %s20, 0
      %p107 = por %p105, %p106
      %p108 = scmp.ne.s32.totalorder %s94, %s95
      %p109 = scmp.eq.s32.totalorder %s21, 1
      %p110 = por %p108, %p109
      %p112 = scmp.ne.s32.totalorder %s95, %s111
      %p113 = scmp.eq.s32.totalorder %s21, 0
      %p114 = por %p112, %p113
      %s115 = ssub.s32 %s22, %s34
      %s116 = ssub.s32 %s23, %s30
      %s117 = sor.u32 %s115, %s116
      %p118 = scmp.eq.s32.totalorder %s117, 0
      %s120 = sadd.s32 %s119, 1
      %s121 = scalar_select %p118, %s119, %s120
      %p124 = pneg %p118
      %p125 = scmp.eq.s32.totalorder %s15, 1
      %p126 = por %p124, %p125
      %p127 = scmp.ne.s32.totalorder %s119, %s122
      %p128 = scmp.eq.s32.totalorder %s15, 0
      %p129 = por %p127, %p128
      %p130 = scmp.ne.s32.totalorder %s119, %s122
      %p131 = scmp.eq.s32.totalorder %s20, 1
      %p132 = por %p130, %p131
      %p133 = scmp.ne.s32.totalorder %s122, %s123
      %p134 = scmp.eq.s32.totalorder %s20, 0
      %p135 = por %p133, %p134
      %p136 = scmp.ne.s32.totalorder %s122, %s123
      %p137 = scmp.eq.s32.totalorder %s21, 1
      %p138 = por %p136, %p137
      %p140 = scmp.ne.s32.totalorder %s123, %s139
      %p141 = scmp.eq.s32.totalorder %s21, 0
      %p142 = por %p140, %p141
      %p143 = scmp.le.s32.totalorder 1, %s15
      %p144 = scmp.lt.s32.totalorder %s15, 3
      %p145 = pnand %p143, %p144
      %p146 = pneg %p145
      // Predicated region
      $region9: #{tpu_custom_call.1} parent=5 // pred_check
        _
      $region10: #{tpu_custom_call.1} parent=5 // pred_check_branch
        %148 = sbr.rel (%p145) target = $region12
      $region11: #{tpu_custom_call.1} parent=5 // pred_region
        %s149 = ssub.s32 %s15, 1
      $region12: #{tpu_custom_call.1} parent=5 // pred_fallthru
        _
      %p150 = scmp.lt.s32.totalorder %s15, 2
      // Predicated region
      $region13: #{tpu_custom_call.1} parent=5 // pred_check
        %p151 = pneg %p150
      $region14: #{tpu_custom_call.1} parent=5 // pred_check_branch
        %153 = sbr.rel (%p151) target = $region16
      $region15: #{tpu_custom_call.1} parent=5 // pred_region
        // Predicated region
        $region17: #{tpu_custom_call.1} parent=15 // pred_check
          %p154 = pneg %p47
        $region18: #{tpu_custom_call.1} parent=15 // pred_check_branch
          %156 = sbr.rel (%p154) target = $region20
        $region19: #{tpu_custom_call.1} parent=15 // pred_region
          %p157 = scmp.lt.s32.totalorder %s22, 1
          %s158 = scalar_select %p157, %s22, 1
          %s159 = smul.addr %s158, 4
          %s160 = scalar_lea.vmem %s0, %s159
        $region20: #{tpu_custom_call.1} parent=15 // pred_fallthru
          _
        // Predicated region
        $region21: #{tpu_custom_call.1} parent=15 // pred_check
          %p161 = pneg %p73
        $region22: #{tpu_custom_call.1} parent=15 // pred_check_branch
          %163 = sbr.rel (%p161) target = $region24
        $region23: #{tpu_custom_call.1} parent=15 // pred_region
          %p164 = scmp.lt.s32.totalorder %s22, 1
          %s165 = scalar_select %p164, %s22, 1
          %s166 = smul.addr %s165, 4
          %s167 = scalar_lea.vmem %s1, %s166
        $region24: #{tpu_custom_call.1} parent=15 // pred_fallthru
          _
        // Predicated region
        $region25: #{tpu_custom_call.1} parent=15 // pred_check
          %p168 = pneg %p101
        $region26: #{tpu_custom_call.1} parent=15 // pred_check_branch
          %170 = sbr.rel (%p168) target = $region28
        $region27: #{tpu_custom_call.1} parent=15 // pred_region
          %s171 = sand.u32 %s91, 1
          %s172 = scalar_lea.sflag [#allocation3], %s171
          %s173 = sand.u32 %s91, 1
          %s174 = smul.addr %s173, 8
          %s175 = scalar_lea.vmem [#allocation2], %s174
          %s176 = smul.u32 2, %s23
          %178 = vsyncadd %s172, 0
          %s179 = smul.addr %s22, 2
          %s180 = sadd.s32 %s176, %s179
          %s181 = smul.addr %s180, 4
          %s182 = scalar_lea.hbm %s2, %s181
          %s184 = sshll.u32 %s182, 4
          %s185 = int_to_ptr.hbm [resolvable:$true] %s184
          %s186 = sshll.u32 %s175, 4
          %s187 = int_to_ptr.vmem [resolvable:$true] %s186
          %189 = dma.hbm_to_vmem [thread:$0]  %s185, 128, %s187, %s172
        $region28: #{tpu_custom_call.1} parent=15 // pred_fallthru
          _
      $region16: #{tpu_custom_call.1} parent=5 // pred_fallthru
        _
      %p190 = scmp.le.s32.totalorder 1, %s15
      %p191 = scmp.lt.s32.totalorder %s15, 3
      %p192 = pnand %p190, %p191
      %p193 = pneg %p192
      // Predicated region
      $region29: #{tpu_custom_call.1} parent=5 // pred_check
        _
      $region30: #{tpu_custom_call.1} parent=5 // pred_check_branch
        %195 = sbr.rel (%p192) target = $region32
      $region31: #{tpu_custom_call.1} parent=5 // pred_region
        %s196 = ssub.s32 %s15, 1
        %s197 = sand.u32 %s94, 1
        %s198 = scalar_lea.sflag [#allocation3], %s197
        %s199 = sand.u32 %s94, 1
        %s200 = smul.addr %s199, 8
        %s201 = scalar_lea.vmem [#allocation2], %s200
        // Predicated region
        $region33: #{tpu_custom_call.1} parent=31 // pred_check
          %p202 = pneg %p107
        $region34: #{tpu_custom_call.1} parent=31 // pred_check_branch
          %204 = sbr.rel (%p202) target = $region36
        $region35: #{tpu_custom_call.1} parent=31 // pred_region
          %206 = dma.done %s198, 128
        $region36: #{tpu_custom_call.1} parent=31 // pred_fallthru
          _
        %p207 = scmp.lt.s32.totalorder %s24, 1
        %s208 = scalar_select %p207, %s24, 1
        %s209 = smul.addr %s208, 4
        %s210 = scalar_lea.vmem %s0, %s209
        %p211 = pneg %p53
        %p212 = pneg %p50
        %p213 = scmp.lt.s32.totalorder %s24, 1
        %s214 = scalar_select %p213, %s24, 1
        %s215 = smul.addr %s214, 4
        %s216 = scalar_lea.vmem %s1, %s215
        %p217 = pneg %p79
        %p218 = pneg %p76
        %s219 = sand.u32 %s94, 1
        %s220 = scalar_lea.sflag [#allocation3], %s219
        %s221 = sand.u32 %s94, 1
        %s222 = smul.addr %s221, 8
        %s223 = scalar_lea.vmem [#allocation2], %s222
        %p224 = pneg %p107
        %p225 = pneg %p104
        %p226 = pneg %p135
        %p227 = pneg %p132
        %s228 = sand.u32 %s122, 1
        %s229 = scalar_lea.sflag [#allocation4], %s228
        %s230 = sand.u32 %s122, 1
        %s231 = smul.addr %s230, 128
        %s232 = scalar_lea.vmem [#allocation5], %s231
        %p233 = scmp.lt.s32.totalorder %s24, 1
        %s234 = scalar_select %p233, %s24, 1
        %s235 = smul.addr %s234, 4
        %s236 = scalar_lea.vmem %s0, %s235
        %p237 = scmp.lt.s32.totalorder %s24, 1
        %s238 = scalar_select %p237, %s24, 1
        %s239 = smul.addr %s238, 4
        %s240 = scalar_lea.vmem %s1, %s239
        %s241 = smul.u32 2, %s25
        %s242 = smul.u32 2, %s25
        %v243 = vld [vmem:[%s236] sm:$0xf]
        %v244 = vld [vmem:[%s240] sm:$0xf]
        %246 = vset.pattern.permute.xlu0 0
        %247 = vperm.xlu0 %246, %v243
        %v248 = vpop.permute.xlu0 %247
        %v250 = vsub.f32 %v244, %v248
        %v251 = vmul.f32 %v250, %v250
        %vm252 = vcmask 519168
        %v253 = vsel %vm252, %v251, 0.0
        %v254 = vrot.slane %v253, 4
        %v255 = vadd.f32 %v253, %v254
        %v256 = vrot.slane %v255, 2
        %v257 = vadd.f32 %v255, %v256
        %v258 = vrot.slane %v257, 1
        %v259 = vadd.f32 %v257, %v258
        %v260 = vmax.f32 %v259, 1e-24
        %v261 = vrsqrt.pop %v260
        %v262 = vmul.f32 %v261, %v260
        %v263 = vmul.f32 %v262, %v261
        %v264 = vmul.f32 0.5, %v263
        %v265 = vsub.f32 1.5, %v264
        %v266 = vmul.f32 %v261, %v265
        %vm267 = vweird.f32 %v260
        %vm268 = vweird.f32 %v261
        %vm269 = vmor %vm267, %vm268
        %v270 = vsel %vm269, %v261, %v266
        %v271 = vmul.f32 %v250, %v270
        %v272 = vld [vmem:[%s201] sm:$0xff]
        %v274 = vunpack.c.l.s4 839922192
        %v275 = vunpack.c.0.s8 %v274
        %v276 = vperm.slane %v248, %v275
        %v278 = vsub.f32 %v272, %v276
        %v279 = vmul.f32 %v278, %v278
        %281 = vst [vmem:[#allocation1] ss:$2 sm:$0xff] %v279
        %v282 = vld.sshfl [vmem:[#allocation1] sm:$0xff pattern:$0x75316420]
        %v283 = vld.sshfl [vmem:[#allocation1 + $0x8] sm:$0xff pattern:$0x75316420]
        %vm286 = vcmask 1043456
        %v287 = vsel %vm286, %v282, 0.0
        %v288 = vrot.slane %v287, 4
        %v289 = vadd.f32 %v287, %v288
        %v290 = vrot.slane %v289, 2
        %v291 = vadd.f32 %v289, %v290
        %v292 = vrot.slane %v291, 1
        %v293 = vadd.f32 %v291, %v292
        %v294 = vsel %vm286, %v283, 0.0
        %v295 = vrot.slane %v294, 4
        %v296 = vadd.f32 %v294, %v295
        %v297 = vrot.slane %v296, 2
        %v298 = vadd.f32 %v296, %v297
        %v299 = vrot.slane %v298, 1
        %v300 = vadd.f32 %v298, %v299
        %v301 = vmax.f32 %v293, 1e-24
        %v302 = vmax.f32 %v300, 1e-24
        %v303 = vrsqrt.pop %v301
        %v304 = vmul.f32 %v303, %v301
        %v305 = vmul.f32 %v304, %v303
        %v306 = vmul.f32 0.5, %v305
        %v307 = vsub.f32 1.5, %v306
        %v308 = vmul.f32 %v303, %v307
        %vm309 = vweird.f32 %v301
        %vm310 = vweird.f32 %v303
        %vm311 = vmor %vm309, %vm310
        %v312 = vsel %vm311, %v303, %v308
        %v313 = vrsqrt.pop %v302
        %v314 = vmul.f32 %v313, %v302
        %v315 = vmul.f32 %v314, %v313
        %v316 = vmul.f32 0.5, %v315
        %v317 = vsub.f32 1.5, %v316
        %v318 = vmul.f32 %v313, %v317
        %vm319 = vweird.f32 %v302
        %vm320 = vweird.f32 %v313
        %vm321 = vmor %vm319, %vm320
        %v322 = vsel %vm321, %v313, %v318
        %v325 = vrot.slane %v322, 4
        %v326 = vsel %vm286, %v312, %v325
        %v328 = vmul.f32 %v278, %v326
        %329 = vxpose.xlu0.b32.start [1/16] %v271, 128
        %330 = vxpose.xlu0.b32.cont [2/16] 0.0, 128
        %331 = vxpose.xlu0.b32.cont [3/16] 0.0, 128
        %332 = vxpose.xlu0.b32.cont [4/16] 0.0, 128
        %333 = vxpose.xlu0.b32.cont [5/16] 0.0, 128
        %334 = vxpose.xlu0.b32.cont [6/16] 0.0, 128
        %335 = vxpose.xlu0.b32.cont [7/16] 0.0, 128
        %336 = vxpose.xlu0.b32.cont [8/16] 0.0, 128
        %337 = vxpose.xlu0.b32.cont [9/16] 0.0, 128
        %338 = vxpose.xlu0.b32.cont [10/16] 0.0, 128
        %339 = vxpose.xlu0.b32.cont [11/16] 0.0, 128
        %340 = vxpose.xlu0.b32.cont [12/16] 0.0, 128
        %341 = vxpose.xlu0.b32.cont [13/16] 0.0, 128
        %342 = vxpose.xlu0.b32.cont [14/16] 0.0, 128
        %343 = vxpose.xlu0.b32.cont [15/16] 0.0, 128
        %344 = vxpose.xlu0.b32.end [16/16] 0.0, 128
        %v345 = vpop.trf.xlu0
        %v346 = vpop.trf.xlu0
        %v347 = vpop.trf.xlu0
        %v348 = vpop.trf.xlu0
        %v349 = vpop.trf.xlu0
        %v350 = vpop.trf.xlu0
        %v351 = vpop.trf.xlu0
        %v352 = vpop.trf.xlu0
        %v353 = vpop.trf.xlu0
        %v354 = vpop.trf.xlu0
        %v355 = vpop.trf.xlu0
        %v356 = vpop.trf.xlu0
        %v357 = vpop.trf.xlu0
        %v358 = vpop.trf.xlu0
        %v359 = vpop.trf.xlu0
        %v360 = vpop.trf.xlu0
        %362 = vst [vmem:[#allocation1] ss:$2 sm:$0xff] %v328
        %v363 = vld.sshfl [vmem:[#allocation1] sm:$0xff pattern:$0x75316420]
        %v364 = vld.sshfl [vmem:[#allocation1 + $0x8] sm:$0xff pattern:$0x75316420]
        %vm365 = vcmask 31744
        %v367 = vsel %vm365, %v345, 0
        %v370 = vsel %vm365, %v346, 0
        %v373 = vsel %vm365, %v347, 0
        %v376 = vsel %vm365, %v348, 0
        %v379 = vsel %vm365, %v349, 0
        %v382 = vsel %vm365, %v350, 0
        %v385 = vsel %vm365, %v351, 0
        %v388 = vsel %vm365, %v352, 0
        %v390 = vsel %vm286, %v363, 0
        %v392 = vsel %vm286, %v364, 0
        %394 = vmatpush.msra.mxu0 0.0
        %395 = vmatpush.msra.mxu0 0.0
        %396 = vmatpush.msra.mxu0 0.0
        %397 = vmatpush.msra.mxu0 0.0
        %398 = vmatpush.msra.mxu0 0.0
        %399 = vmatpush.msra.mxu0 0.0
        %400 = vmatpush.msra.mxu0 0.0
        %401 = vmatpush.msra.mxu0 0.0
        %402 = vmatpush.msra.mxu0 0.0
        %403 = vmatpush.msra.mxu0 0.0
        %404 = vmatpush.msra.mxu0 0.0
        %405 = vmatpush.msra.mxu0 0.0
        %406 = vmatpush.msra.mxu0 0.0
        %407 = vmatpush.msra.mxu0 0.0
        %408 = vmatpush.msra.mxu0 0.0
        %409 = vmatpush.msra.mxu0 %v390
        %410 = vmatmul.f32.gmra.mxu0 %v367
        %v411 = vpop.f32.mrf.mxu0
        %v412 = vadd.f32 0.0, %v411
        %413 = vmatmul.f32.gmra.mxu0 %v370
        %v414 = vpop.f32.mrf.mxu0
        %v415 = vadd.f32 0.0, %v414
        %416 = vmatmul.f32.gmra.mxu0 %v373
        %v417 = vpop.f32.mrf.mxu0
        %v418 = vadd.f32 0.0, %v417
        %419 = vmatmul.f32.gmra.mxu0 %v376
        %v420 = vpop.f32.mrf.mxu0
        %v421 = vadd.f32 0.0, %v420
        %422 = vmatmul.f32.gmra.mxu0 %v379
        %v423 = vpop.f32.mrf.mxu0
        %v424 = vadd.f32 0.0, %v423
        %425 = vmatmul.f32.gmra.mxu0 %v382
        %v426 = vpop.f32.mrf.mxu0
        %v427 = vadd.f32 0.0, %v426
        %428 = vmatmul.f32.gmra.mxu0 %v385
        %v429 = vpop.f32.mrf.mxu0
        %v430 = vadd.f32 0.0, %v429
        %431 = vmatmul.f32.gmra.mxu0 %v388
        %v432 = vpop.f32.mrf.mxu0
        %v433 = vadd.f32 0.0, %v432
        %434 = vdwg.mxu0
        %435 = vmatpush.msra.mxu0 0.0
        %436 = vmatpush.msra.mxu0 0.0
        %437 = vmatpush.msra.mxu0 0.0
        %438 = vmatpush.msra.mxu0 0.0
        %439 = vmatpush.msra.mxu0 0.0
        %440 = vmatpush.msra.mxu0 0.0
        %441 = vmatpush.msra.mxu0 0.0
        %442 = vmatpush.msra.mxu0 0.0
        %443 = vmatpush.msra.mxu0 0.0
        %444 = vmatpush.msra.mxu0 0.0
        %445 = vmatpush.msra.mxu0 0.0
        %446 = vmatpush.msra.mxu0 0.0
        %447 = vmatpush.msra.mxu0 0.0
        %448 = vmatpush.msra.mxu0 0.0
        %449 = vmatpush.msra.mxu0 0.0
        %450 = vmatpush.msra.mxu0 %v392
        %451 = vmatmul.f32.gmra.mxu0 %v367
        %v452 = vpop.f32.mrf.mxu0
        %v453 = vadd.f32 0.0, %v452
        %454 = vmatmul.f32.gmra.mxu0 %v370
        %v455 = vpop.f32.mrf.mxu0
        %v456 = vadd.f32 0.0, %v455
        %457 = vmatmul.f32.gmra.mxu0 %v373
        %v458 = vpop.f32.mrf.mxu0
        %v459 = vadd.f32 0.0, %v458
        %460 = vmatmul.f32.gmra.mxu0 %v376
        %v461 = vpop.f32.mrf.mxu0
        %v462 = vadd.f32 0.0, %v461
        %463 = vmatmul.f32.gmra.mxu0 %v379
        %v464 = vpop.f32.mrf.mxu0
        %v465 = vadd.f32 0.0, %v464
        %466 = vmatmul.f32.gmra.mxu0 %v382
        %v467 = vpop.f32.mrf.mxu0
        %v468 = vadd.f32 0.0, %v467
        %469 = vmatmul.f32.gmra.mxu0 %v385
        %v470 = vpop.f32.mrf.mxu0
        %v471 = vadd.f32 0.0, %v470
        %472 = vmatmul.f32.gmra.mxu0 %v388
        %v473 = vpop.f32.mrf.mxu0
        %v474 = vadd.f32 0.0, %v473
        %475 = vdwg.mxu0
        %476 = vst [vmem:[%s232] sm:$0xff] %v412
        %477 = vst [vmem:[%s232 + $0x8] sm:$0xff] %v453
        %478 = vst [vmem:[%s232 + $0x10] sm:$0xff] %v415
        %479 = vst [vmem:[%s232 + $0x18] sm:$0xff] %v456
        %480 = vst [vmem:[%s232 + $0x20] sm:$0xff] %v418
        %481 = vst [vmem:[%s232 + $0x28] sm:$0xff] %v459
        %482 = vst [vmem:[%s232 + $0x30] sm:$0xff] %v421
        %483 = vst [vmem:[%s232 + $0x38] sm:$0xff] %v462
        %484 = vst [vmem:[%s232 + $0x40] sm:$0xff] %v424
        %485 = vst [vmem:[%s232 + $0x48] sm:$0xff] %v465
        %486 = vst [vmem:[%s232 + $0x50] sm:$0xff] %v427
        %487 = vst [vmem:[%s232 + $0x58] sm:$0xff] %v468
        %488 = vst [vmem:[%s232 + $0x60] sm:$0xff] %v430
        %489 = vst [vmem:[%s232 + $0x68] sm:$0xff] %v471
        %490 = vst [vmem:[%s232 + $0x70] sm:$0xff] %v433
        %491 = vst [vmem:[%s232 + $0x78] sm:$0xff] %v474
        %s492 = sand.u32 %s122, 1
        %s493 = scalar_lea.sflag [#allocation4], %s492
        %s494 = sand.u32 %s122, 1
        %s495 = smul.addr %s494, 128
        %s496 = scalar_lea.vmem [#allocation5], %s495
        // Predicated region
        $region37: #{tpu_custom_call.1} parent=31 // pred_check
          %p497 = pneg %p132
        $region38: #{tpu_custom_call.1} parent=31 // pred_check_branch
          %499 = sbr.rel (%p497) target = $region40
        $region39: #{tpu_custom_call.1} parent=31 // pred_region
          %s500 = smul.u32 2, %s25
          %502 = vsyncadd %s493, 0
          %s503 = smul.addr %s24, 16
          %s504 = sadd.s32 %s500, %s503
          %s505 = smul.addr %s504, 8
          %s506 = scalar_lea.hbm %s3, %s505
          %s507 = sshll.u32 %s496, 4
          %s508 = int_to_ptr.vmem [resolvable:$true] %s507
          %s509 = sshll.u32 %s506, 4
          %s510 = int_to_ptr.hbm [resolvable:$true] %s509
          %515 = dma.vmem_to_hbm [thread:$0]  %s508, 2048, %s510, %s493, 256, 256, 16
        $region40: #{tpu_custom_call.1} parent=31 // pred_fallthru
          _
      $region32: #{tpu_custom_call.1} parent=5 // pred_fallthru
        _
      %p516 = scmp.le.s32.totalorder 2, %s15
      // Predicated region
      $region41: #{tpu_custom_call.1} parent=5 // pred_check
        %p517 = pneg %p516
      $region42: #{tpu_custom_call.1} parent=5 // pred_check_branch
        %519 = sbr.rel (%p517) target = $region44
      $region43: #{tpu_custom_call.1} parent=5 // pred_region
        %s520 = ssub.s32 %s15, 2
        // Predicated region
        $region45: #{tpu_custom_call.1} parent=43 // pred_check
          %p521 = pneg %p138
        $region46: #{tpu_custom_call.1} parent=43 // pred_check_branch
          %523 = sbr.rel (%p521) target = $region48
        $region47: #{tpu_custom_call.1} parent=43 // pred_region
          %s524 = sand.u32 %s123, 1
          %s525 = scalar_lea.sflag [#allocation4], %s524
          %s526 = sand.u32 %s123, 1
          %s527 = smul.addr %s526, 128
          %s528 = scalar_lea.vmem [#allocation5], %s527
          %530 = dma.done %s525, 2048
        $region48: #{tpu_custom_call.1} parent=43 // pred_fallthru
          _
      $region44: #{tpu_custom_call.1} parent=5 // pred_fallthru
        _
    $region6: #{tpu_custom_call.1} parent=1 // loop_footer
      %s19 = sadd.s32 1, %s15
    $region7: #{tpu_custom_call.1} parent=1 // loop_footer_branch
      %14 = sbr.rel target = $region3
    $region8: #{tpu_custom_call.1} parent=1 // loop_exit
      _
    %531 = vsyncpa [#allocation3], 1
    %s532 = scalar_lea.sflag [#allocation3], 1
    %533 = vsyncpa %s532, 1
    %534 = vsyncpa [#allocation4], 1
    %s535 = scalar_lea.sflag [#allocation4], 1
    %536 = vsyncpa %s535, 1

</llo_original>
